<compile_context>
chip_gen: v6e
topology: v6e:2x2x1
jax: 0.10.0
libtpu: 0.0.40
codegen_flags: <defaults>
</compile_context>

<pallas_src>
import functools

import jax
import jax.numpy as jnp
from jax.experimental import pallas as pl
from jax.experimental.pallas import tpu as pltpu

VEC_LEN = 50
FEAT = 5 * VEC_LEN          # 250 (in_features == out_features)
FEAT_PAD = 256              # lane-dense padded K and N (2 x 128)
MAX_TILE_B = 256            # batch tile for the gridded path


def _linear_kernel(x_ref, wt_ref, b_ref, o_ref):
    # x_ref:  (TILE_B, 256) bf16   wt_ref: (256, 256) bf16
    # b_ref:  (1, 256)      f32    o_ref:  (TILE_B, 256) f32
    acc = jnp.dot(x_ref[...], wt_ref[...], preferred_element_type=jnp.float32)
    o_ref[...] = (acc + b_ref[...]).astype(o_ref.dtype)


def prepare_params(weight, bias, param_dtype=jnp.bfloat16):
    """One-time parameter prep (do this OUTSIDE the per-step call path).

    weight: (250, 250) f32, PyTorch convention (out_features, in_features)
    bias:   (250,)     f32

    Returns:
      wt_pad: (256, 256) param_dtype -- weight.T, zero-padded K rows & N cols
      b_pad:  (1, 256)   f32         -- bias with zero-padded lanes
    """
    wt_pad = jnp.zeros((FEAT_PAD, FEAT_PAD), param_dtype)
    wt_pad = wt_pad.at[:FEAT, :FEAT].set(weight.T.astype(param_dtype))
    b_pad = jnp.zeros((1, FEAT_PAD), jnp.float32)
    b_pad = b_pad.at[:, :FEAT].set(bias.astype(jnp.float32))
    return wt_pad, b_pad


@functools.partial(jax.jit, static_argnames=("return_padded",))
def nn_future_forward(x, wt_pad, b_pad, *, return_padded=False):
    """Pallas equivalent of NNFuture.forward.

    x:      (B, 250) float32
    wt_pad: (256, 256) bf16 from prepare_params
    b_pad:  (1, 256)   f32  from prepare_params

    Returns (B, 250) f32, or the raw (B_pad, 256) padded slab if
    return_padded=True (padded rows/lanes are exact zeros).
    """
    B = x.shape[0]
    b_pad_rows = ((B + 7) // 8) * 8          # sublane-aligned batch
    tile_b = min(b_pad_rows, MAX_TILE_B)
    grid = (pl.cdiv(b_pad_rows, tile_b),)

    # Zero-pad batch rows + K lanes and cast to the weight dtype in one fused
    # wrapper op (padding is required anyway; cast halves the x DMA bytes).
    x_padded = jnp.zeros((b_pad_rows, FEAT_PAD), wt_pad.dtype)
    x_padded = x_padded.at[:B, :FEAT].set(x.astype(wt_pad.dtype))

    y_padded = pl.pallas_call(
        _linear_kernel,
        out_shape=jax.ShapeDtypeStruct((b_pad_rows, FEAT_PAD), jnp.float32),
        grid=grid,
        in_specs=[
            # x: tiled over batch
            pl.BlockSpec((tile_b, FEAT_PAD), lambda i: (i, 0)),
            # weight: constant block index -> DMA'd once, VMEM-resident
            pl.BlockSpec((FEAT_PAD, FEAT_PAD), lambda i: (0, 0)),
            # bias: constant block index -> VMEM-resident
            pl.BlockSpec((1, FEAT_PAD), lambda i: (0, 0)),
        ],
        out_specs=pl.BlockSpec((tile_b, FEAT_PAD), lambda i: (i, 0)),
        compiler_params=pltpu.CompilerParams(
            dimension_semantics=("parallel",)),  # v7x megacore batch split
    )(x_padded, wt_pad, b_pad)

    if return_padded:
        return y_padded
    return y_padded[:B, :FEAT]


if __name__ == "__main__":
    key = jax.random.PRNGKey(0)
    k_x, k_w, k_b = jax.random.split(key, 3)

    B = 8
    # Deterministic parameter init mimicking nn.Linear's default
    # U(-1/sqrt(in_features), 1/sqrt(in_features)).
    bound = 1.0 / jnp.sqrt(jnp.float32(FEAT))
    weight = jax.random.uniform(k_w, (FEAT, FEAT), jnp.float32, -bound, bound)
    bias = jax.random.uniform(k_b, (FEAT,), jnp.float32, -bound, bound)
    x = jax.random.normal(k_x, (B, FEAT), jnp.float32)

    # One-time prep (transpose + pad + bf16 cast), outside the per-call path.
    wt_pad, b_pad = prepare_params(weight, bias)
    wt_pad, b_pad = jax.block_until_ready((wt_pad, b_pad))

    y = nn_future_forward(x, wt_pad, b_pad)
    y = jax.block_until_ready(y)

    # Cross-check against plain-JAX reference of the PyTorch semantics.
    # Tolerance reflects the accepted bf16 operand quantization (f32 accumulate).
    y_ref = x @ weight.T + bias
    assert y.shape == (B, FEAT)
    assert jnp.allclose(y, y_ref, atol=2e-2, rtol=2e-2), (
        float(jnp.max(jnp.abs(y - y_ref))))

    print("KERNEL_OK")
</pallas_src>

<mosaic_0001>
module attributes {stable_mosaic.version = 11 : i64} {
  func.func @_linear_kernel(%arg0: i32, %arg1: memref<8x256xbf16, #tpu.memory_space<vmem>>, %arg2: memref<256x256xbf16, #tpu.memory_space<vmem>>, %arg3: memref<1x256xf32, #tpu.memory_space<vmem>>, %arg4: memref<8x256xf32, #tpu.memory_space<vmem>>) attributes {dimension_semantics = [#tpu.dimension_semantics<parallel>], iteration_bounds = array<i64: 1>, scalar_prefetch = 0 : i64, scratch_operands = 0 : i64, tpu.core_type = #tpu.core_type<tc>, window_params = [{transform_indices = @transform_0, window_bounds = array<i64: 8, 256>}, {pipeline_mode = #tpu.pipeline_mode<synchronous>, transform_indices = @transform_1, window_bounds = array<i64: 256, 256>}, {pipeline_mode = #tpu.pipeline_mode<synchronous>, transform_indices = @transform_2, window_bounds = array<i64: 1, 256>}, {transform_indices = @transform_3, window_bounds = array<i64: 8, 256>}]} {
    %c0 = arith.constant 0 : index
    %c0_0 = arith.constant 0 : index
    %0 = vector.load %arg1[%c0, %c0_0] : memref<8x256xbf16, #tpu.memory_space<vmem>>, vector<8x256xbf16>
    %c0_1 = arith.constant 0 : index
    %c0_2 = arith.constant 0 : index
    %1 = vector.load %arg2[%c0_1, %c0_2] : memref<256x256xbf16, #tpu.memory_space<vmem>>, vector<256x256xbf16>
    %cst = arith.constant dense<0.000000e+00> : vector<8x256xf32>
    %2 = tpu.matmul %0, %1, %cst {dimension_numbers = #tpu.dot_dimension_numbers<[1], [0], [0], [1], [0, 0, 1, 1], [], []>} : vector<8x256xbf16>, vector<256x256xbf16>, vector<8x256xf32> -> vector<8x256xf32>
    %c0_3 = arith.constant 0 : index
    %c0_4 = arith.constant 0 : index
    %3 = vector.load %arg3[%c0_3, %c0_4] : memref<1x256xf32, #tpu.memory_space<vmem>>, vector<1x256xf32>
    %4 = vector.broadcast %3 : vector<1x256xf32> to vector<8x256xf32>
    %5 = arith.addf %2, %4 : vector<8x256xf32>
    %c0_5 = arith.constant 0 : index
    %c0_6 = arith.constant 0 : index
    %6 = vector.load %arg4[%c0_5, %c0_6] : memref<8x256xf32, #tpu.memory_space<vmem>>, vector<8x256xf32>
    tpu.vector_store %arg4[%c0_5, %c0_6], %5 {strides = array<i32>} : memref<8x256xf32, #tpu.memory_space<vmem>>, vector<8x256xf32>,
    return
  }
  func.func @transform_0(%arg0: i32) -> (i32, i32) {
    %c0_i32 = arith.constant 0 : i32
    %c0_i32_0 = arith.constant 0 : i32
    return %arg0, %c0_i32 : i32, i32
  }
  func.func @transform_1(%arg0: i32) -> (i32, i32) {
    %c0_i32 = arith.constant 0 : i32
    %c0_i32_0 = arith.constant 0 : i32
    %c0_i32_1 = arith.constant 0 : i32
    return %c0_i32, %c0_i32_0 : i32, i32
  }
  func.func @transform_2(%arg0: i32) -> (i32, i32) {
    %c0_i32 = arith.constant 0 : i32
    %c0_i32_0 = arith.constant 0 : i32
    %c0_i32_1 = arith.constant 0 : i32
    return %c0_i32, %c0_i32_0 : i32, i32
  }
  func.func @transform_3(%arg0: i32) -> (i32, i32) {
    %c0_i32 = arith.constant 0 : i32
    %c0_i32_0 = arith.constant 0 : i32
    return %arg0, %c0_i32 : i32, i32
  }
}

</mosaic_0001>

<llo_original>
// kernel: nn_future_forward.1
$region0: #{nn_future_forward.1}
  #allocation0 [shape = 'u32[]', space=smem, size = 0x4, offset = 0x4, fixed_abs, tag = 'smem constant byte address 0x4 - core index']
  #allocation1 [shape = 'u32[144,128]{1,0:T(1,128)}', space=vmem, size = 0x12000, scoped, tag = 'internal scratch']
  %s0 = inlined_call_operand.vmem [shape: bf16[8,256], index: 0, kind: input, shape index: {}]
  %s1 = inlined_call_operand.hbm [shape: bf16[256,256], index: 1, kind: input, shape index: {}]
  %s2 = inlined_call_operand.vmem [shape: f32[1,256], index: 2, kind: input, shape index: {}]
  %s3 = inlined_call_operand.hbm [shape: f32[8,256], index: 3, kind: output, shape index: {}]
  %s4 = sld [smem:[#allocation0]]
  $region26: #{nn_future_forward.1} parent=0
    _
  %s6 = ssub.s32 1, %s4
  %s7 = scalar_select 0, %s6, %s4
  $region1: #{nn_future_forward.1} parent=0
    #allocation2 [shape = 'u8[131072]{0}', space=vmem, size = 0x20000, scoped, tag = 'input window, operand 1, single buffered']
    #allocation3 [shape = 's32[1]{0}', space=sflag, size = 0x4, scoped, tag = 'scoped memory for nn_future_forward.1']
    #allocation4 [shape = 's32[1]{0}', space=sflag, size = 0x4, scoped, tag = 'scoped memory for nn_future_forward.1']
    #allocation5 [shape = 'u8[8192]{0}', space=vmem, size = 0x2000, scoped, tag = 'output window, operand 0, single buffered']
    %8 = vsyncpa [#allocation3], 0
    %9 = vsyncpa [#allocation4], 0
    // Predicated region
    $region2: #{nn_future_forward.1} parent=1 // pred_check
      _
    $region3: #{nn_future_forward.1} parent=1 // pred_check_branch
      %11 = sbr.rel (0) target = $region5
    $region4: #{nn_future_forward.1} parent=1 // pred_region
      _
    $region5: #{nn_future_forward.1} parent=1 // pred_fallthru
      _
    // Predicated region
    $region6: #{nn_future_forward.1} parent=1 // pred_check
      _
    $region7: #{nn_future_forward.1} parent=1 // pred_check_branch
      %13 = sbr.rel (0) target = $region9
    $region8: #{nn_future_forward.1} parent=1 // pred_region
      %s15 = ssub.s32 4096, 4096
      %16 = vsyncadd [#allocation3], %s15
      %s17 = sshll.u32 [#allocation2], 4
      %s18 = int_to_ptr.vmem [resolvable:$true] %s17
      %23 = dma.hbm_to_vmem [thread:$0]  %s1, 4096, %s18, [#allocation3], 128, 128, 8
    $region9: #{nn_future_forward.1} parent=1 // pred_fallthru
      _
    // Predicated region
    $region10: #{nn_future_forward.1} parent=1 // pred_check
      _
    $region11: #{nn_future_forward.1} parent=1 // pred_check_branch
      %25 = sbr.rel (0) target = $region13
    $region12: #{nn_future_forward.1} parent=1 // pred_region
      _
    $region13: #{nn_future_forward.1} parent=1 // pred_fallthru
      _
    // Predicated region
    $region14: #{nn_future_forward.1} parent=1 // pred_check
      _
    $region15: #{nn_future_forward.1} parent=1 // pred_check_branch
      %27 = sbr.rel (0) target = $region17
    $region16: #{nn_future_forward.1} parent=1 // pred_region
      %28 = dma.done [#allocation3], 4096
    $region17: #{nn_future_forward.1} parent=1 // pred_fallthru
      _
    %v29 = vld [vmem:[%s0] sm:$0xff]
    %v30 = vld [vmem:[#allocation2] sm:$0xff]
    %v31 = vld [vmem:[#allocation2 + $0x8] sm:$0xff]
    %v32 = vld [vmem:[#allocation2 + $0x10] sm:$0xff]
    %v33 = vld [vmem:[#allocation2 + $0x18] sm:$0xff]
    %v34 = vld [vmem:[#allocation2 + $0x20] sm:$0xff]
    %v35 = vld [vmem:[#allocation2 + $0x28] sm:$0xff]
    %v36 = vld [vmem:[#allocation2 + $0x30] sm:$0xff]
    %v37 = vld [vmem:[#allocation2 + $0x38] sm:$0xff]
    %v38 = vld [vmem:[#allocation2 + $0x40] sm:$0xff]
    %v39 = vld [vmem:[#allocation2 + $0x48] sm:$0xff]
    %v40 = vld [vmem:[#allocation2 + $0x50] sm:$0xff]
    %v41 = vld [vmem:[#allocation2 + $0x58] sm:$0xff]
    %v42 = vld [vmem:[#allocation2 + $0x60] sm:$0xff]
    %v43 = vld [vmem:[#allocation2 + $0x68] sm:$0xff]
    %v44 = vld [vmem:[#allocation2 + $0x70] sm:$0xff]
    %v45 = vld [vmem:[#allocation2 + $0x78] sm:$0xff]
    %v46 = vld [vmem:[#allocation2 + $0x80] sm:$0xff]
    %v47 = vld [vmem:[#allocation2 + $0x88] sm:$0xff]
    %v48 = vld [vmem:[#allocation2 + $0x90] sm:$0xff]
    %v49 = vld [vmem:[#allocation2 + $0x98] sm:$0xff]
    %v50 = vld [vmem:[#allocation2 + $0xa0] sm:$0xff]
    %v51 = vld [vmem:[#allocation2 + $0xa8] sm:$0xff]
    %v52 = vld [vmem:[#allocation2 + $0xb0] sm:$0xff]
    %v53 = vld [vmem:[#allocation2 + $0xb8] sm:$0xff]
    %v54 = vld [vmem:[#allocation2 + $0xc0] sm:$0xff]
    %v55 = vld [vmem:[#allocation2 + $0xc8] sm:$0xff]
    %v56 = vld [vmem:[#allocation2 + $0xd0] sm:$0xff]
    %v57 = vld [vmem:[#allocation2 + $0xd8] sm:$0xff]
    %v58 = vld [vmem:[#allocation2 + $0xe0] sm:$0xff]
    %v59 = vld [vmem:[#allocation2 + $0xe8] sm:$0xff]
    %v60 = vld [vmem:[#allocation2 + $0xf0] sm:$0xff]
    %v61 = vld [vmem:[#allocation2 + $0xf8] sm:$0xff]
    %v62 = vld [vmem:[%s2] sm:$0x3]
    %v64 = vlaneseq
    %v65 = vshrl.u32 %v64, 7
    %v66 = vsub.s32 0, %v65
    %v67 = vrot.slane %v62, %v66
    %v68 = vlaneseq
    %v69 = vshrl.u32 %v68, 7
    %v70 = vsub.s32 1, %v69
    %v71 = vrot.slane %v62, %v70
    %v75 = vunpack.c.l.b16 %v29
    %v76 = vunpack.c.h.b16 %v29
    %v77 = vpack.c.b16 %v75, %v75
    %v78 = vpack.c.b16 %v76, %v76
    %v113 = vunpack.c.l.b16 %v30
    %v114 = vunpack.c.h.b16 %v30
    %v115 = vunpack.c.l.b16 %v31
    %v116 = vunpack.c.h.b16 %v31
    %v117 = vunpack.c.l.b16 %v32
    %v118 = vunpack.c.h.b16 %v32
    %v119 = vunpack.c.l.b16 %v33
    %v120 = vunpack.c.h.b16 %v33
    %v121 = vunpack.c.l.b16 %v34
    %v122 = vunpack.c.h.b16 %v34
    %v123 = vunpack.c.l.b16 %v35
    %v124 = vunpack.c.h.b16 %v35
    %v125 = vunpack.c.l.b16 %v36
    %v126 = vunpack.c.h.b16 %v36
    %v127 = vunpack.c.l.b16 %v37
    %v128 = vunpack.c.h.b16 %v37
    %v129 = vunpack.c.l.b16 %v38
    %v130 = vunpack.c.h.b16 %v38
    %v131 = vunpack.c.l.b16 %v39
    %v132 = vunpack.c.h.b16 %v39
    %v133 = vunpack.c.l.b16 %v40
    %v134 = vunpack.c.h.b16 %v40
    %v135 = vunpack.c.l.b16 %v41
    %v136 = vunpack.c.h.b16 %v41
    %v137 = vunpack.c.l.b16 %v42
    %v138 = vunpack.c.h.b16 %v42
    %v139 = vunpack.c.l.b16 %v43
    %v140 = vunpack.c.h.b16 %v43
    %v141 = vunpack.c.l.b16 %v44
    %v142 = vunpack.c.h.b16 %v44
    %v143 = vunpack.c.l.b16 %v45
    %v144 = vunpack.c.h.b16 %v45
    %v145 = vunpack.c.l.b16 %v46
    %v146 = vunpack.c.h.b16 %v46
    %v147 = vunpack.c.l.b16 %v47
    %v148 = vunpack.c.h.b16 %v47
    %v149 = vunpack.c.l.b16 %v48
    %v150 = vunpack.c.h.b16 %v48
    %v151 = vunpack.c.l.b16 %v49
    %v152 = vunpack.c.h.b16 %v49
    %v153 = vunpack.c.l.b16 %v50
    %v154 = vunpack.c.h.b16 %v50
    %v155 = vunpack.c.l.b16 %v51
    %v156 = vunpack.c.h.b16 %v51
    %v157 = vunpack.c.l.b16 %v52
    %v158 = vunpack.c.h.b16 %v52
    %v159 = vunpack.c.l.b16 %v53
    %v160 = vunpack.c.h.b16 %v53
    %v161 = vunpack.c.l.b16 %v54
    %v162 = vunpack.c.h.b16 %v54
    %v163 = vunpack.c.l.b16 %v55
    %v164 = vunpack.c.h.b16 %v55
    %v165 = vunpack.c.l.b16 %v56
    %v166 = vunpack.c.h.b16 %v56
    %v167 = vunpack.c.l.b16 %v57
    %v168 = vunpack.c.h.b16 %v57
    %v169 = vunpack.c.l.b16 %v58
    %v170 = vunpack.c.h.b16 %v58
    %v171 = vunpack.c.l.b16 %v59
    %v172 = vunpack.c.h.b16 %v59
    %v173 = vunpack.c.l.b16 %v60
    %v174 = vunpack.c.h.b16 %v60
    %v175 = vunpack.c.l.b16 %v61
    %v176 = vunpack.c.h.b16 %v61
    %v177 = vpack.c.b16 %v115, %v113
    %v178 = vpack.c.b16 %v116, %v114
    %v179 = vpack.c.b16 %v119, %v117
    %v180 = vpack.c.b16 %v120, %v118
    %v181 = vpack.c.b16 %v123, %v121
    %v182 = vpack.c.b16 %v124, %v122
    %v183 = vpack.c.b16 %v127, %v125
    %v184 = vpack.c.b16 %v128, %v126
    %v185 = vpack.c.b16 %v131, %v129
    %v186 = vpack.c.b16 %v132, %v130
    %v187 = vpack.c.b16 %v135, %v133
    %v188 = vpack.c.b16 %v136, %v134
    %v189 = vpack.c.b16 %v139, %v137
    %v190 = vpack.c.b16 %v140, %v138
    %v191 = vpack.c.b16 %v143, %v141
    %v192 = vpack.c.b16 %v144, %v142
    %v193 = vpack.c.b16 %v147, %v145
    %v194 = vpack.c.b16 %v148, %v146
    %v195 = vpack.c.b16 %v151, %v149
    %v196 = vpack.c.b16 %v152, %v150
    %v197 = vpack.c.b16 %v155, %v153
    %v198 = vpack.c.b16 %v156, %v154
    %v199 = vpack.c.b16 %v159, %v157
    %v200 = vpack.c.b16 %v160, %v158
    %v201 = vpack.c.b16 %v163, %v161
    %v202 = vpack.c.b16 %v164, %v162
    %v203 = vpack.c.b16 %v167, %v165
    %v204 = vpack.c.b16 %v168, %v166
    %v205 = vpack.c.b16 %v171, %v169
    %v206 = vpack.c.b16 %v172, %v170
    %v207 = vpack.c.b16 %v175, %v173
    %v208 = vpack.c.b16 %v176, %v174
    %241 = vmatprep.subr.bf16.mxu0 %v192
    %242 = vmatpush1.bf16.msra.mxu0 %v191
    %243 = vmatprep.subr.bf16.mxu0 %v190
    %244 = vmatpush1.bf16.msra.mxu0 %v189
    %245 = vmatprep.subr.bf16.mxu0 %v188
    %246 = vmatpush1.bf16.msra.mxu0 %v187
    %247 = vmatprep.subr.bf16.mxu0 %v186
    %248 = vmatpush1.bf16.msra.mxu0 %v185
    %249 = vmatprep.subr.bf16.mxu0 %v184
    %250 = vmatpush1.bf16.msra.mxu0 %v183
    %251 = vmatprep.subr.bf16.mxu0 %v182
    %252 = vmatpush1.bf16.msra.mxu0 %v181
    %253 = vmatprep.subr.bf16.mxu0 %v180
    %254 = vmatpush1.bf16.msra.mxu0 %v179
    %255 = vmatprep.subr.bf16.mxu0 %v178
    %256 = vmatpush1.bf16.msra.mxu0 %v177
    %257 = vmatprep.subr.bf16.mxu0 %v208
    %258 = vmatpush2.bf16.msra.mxu0 %v207
    %259 = vmatprep.subr.bf16.mxu0 %v206
    %260 = vmatpush2.bf16.msra.mxu0 %v205
    %261 = vmatprep.subr.bf16.mxu0 %v204
    %262 = vmatpush2.bf16.msra.mxu0 %v203
    %263 = vmatprep.subr.bf16.mxu0 %v202
    %264 = vmatpush2.bf16.msra.mxu0 %v201
    %265 = vmatprep.subr.bf16.mxu0 %v200
    %266 = vmatpush2.bf16.msra.mxu0 %v199
    %267 = vmatprep.subr.bf16.mxu0 %v198
    %268 = vmatpush2.bf16.msra.mxu0 %v197
    %269 = vmatprep.subr.bf16.mxu0 %v196
    %270 = vmatpush2.bf16.msra.mxu0 %v195
    %271 = vmatprep.subr.bf16.mxu0 %v194
    %272 = vmatpush2.bf16.msra.mxu0 %v193
    %273 = vmatprep.mubr.bf16.mxu0 %v78
    %274 = vmatmul.mubr.bf16.gmra.mxu0 %v77
    %v275 = vpop.f32.mrf.mxu0
    %v276 = vadd.f32 %v67, %v275
    %v277 = vpop.f32.mrf.mxu0
    %v278 = vadd.f32 %v71, %v277
    %v279 = vpop.f32.mrf.mxu0
    %v280 = vpop.f32.mrf.mxu0
    %281 = vdwg.mxu0
    %282 = vst [vmem:[#allocation5] sm:$0xff] %v276
    %283 = vst [vmem:[#allocation5 + $0x8] sm:$0xff] %v278
    // Predicated region
    $region18: #{nn_future_forward.1} parent=1 // pred_check
      _
    $region19: #{nn_future_forward.1} parent=1 // pred_check_branch
      %285 = sbr.rel (0) target = $region21
    $region20: #{nn_future_forward.1} parent=1 // pred_region
      %s287 = ssub.s32 256, 256
      %288 = vsyncadd [#allocation4], %s287
      %s290 = sshll.u32 [#allocation5], 4
      %s291 = int_to_ptr.vmem [resolvable:$true] %s290
      %293 = dma.vmem_to_hbm [thread:$0]  %s291, 256, %s3, [#allocation4]
    $region21: #{nn_future_forward.1} parent=1 // pred_fallthru
      _
    // Predicated region
    $region22: #{nn_future_forward.1} parent=1 // pred_check
      _
    $region23: #{nn_future_forward.1} parent=1 // pred_check_branch
      %295 = sbr.rel (0) target = $region25
    $region24: #{nn_future_forward.1} parent=1 // pred_region
      %296 = dma.done [#allocation4], 256
    $region25: #{nn_future_forward.1} parent=1 // pred_fallthru
      _
    %297 = vsyncpa [#allocation3], 1
    %298 = vsyncpa [#allocation4], 1

</llo_original>
